<compile_context>
chip_gen: v7x
topology: tpu7x:2x2x1
jax: 0.10.0
libtpu: 0.0.40
codegen_flags: <defaults>
</compile_context>

<pallas_src>
import functools

import jax
import jax.numpy as jnp
from jax.experimental import pallas as pl
from jax.experimental.pallas import tpu as pltpu


def _dwsep_kernel(x_ref, w_band_ref, bias_ref, o_ref, *, K, H_out):
    """One grid step = Nb images, lane-dense layouts.

    x_ref      : (Nb, Hp, Lpad)           zero-padded input, (w, c) interleaved, lane-padded
    w_band_ref : (K, Lpad, W_out*Cout)    banded fused depthwise+pointwise weights
    bias_ref   : (1, W_out*Cout)          pointwise bias with depthwise bias folded in
    o_ref      : (Nb, H_out, W_out*Cout)
    """
    Nb = o_ref.shape[0]
    Nout = o_ref.shape[2]
    Lpad = x_ref.shape[2]

    # Fused depthwise + pointwise conv: K lane-dense MXU matmuls over
    # row-shifted views of the input.  All slices are static ref slices.
    acc = jnp.zeros((Nb * H_out, Nout), jnp.float32)
    for ky in range(K):
        rows = x_ref[:, ky:ky + H_out, :].reshape(Nb * H_out, Lpad)
        acc = acc + jnp.dot(rows, w_band_ref[ky],
                            preferred_element_type=jnp.float32)

    acc = acc + bias_ref[...]
    o_ref[...] = acc.reshape(Nb, H_out, Nout).astype(o_ref.dtype)


def _pick_batch_block(N, Hp, Lpad, H_out, Nout):
    """Images per grid step: fill MXU rows, stay tiny in VMEM, keep grid >= 2."""
    per_img_bytes = (Hp * Lpad + H_out * Nout) * 4 * 2        # double-buffered in+out
    vmem_cap = max(1, (8 << 20) // max(per_img_bytes, 1))
    rows_cap = max(1, -(-256 // H_out))                        # target M ~ 256 rows
    grid_cap = max(1, N // 2)                                  # >= 2 steps for v7x 2 TCs
    target = max(1, min(N, vmem_cap, rows_cap, grid_cap))
    nb = 1
    for d in range(1, target + 1):                             # largest divisor of N <= target
        if N % d == 0:
            nb = d
    return nb


def depthwise_separable_conv(x_nchw, params, *, kernel_size, padding=0,
                             kernels_per_layer=1):
    """Forward pass matching DepthwiseSeparableConv. Input/output are NCHW."""
    w_dw, b_dw = params["w_dw"], params["b_dw"]
    w_pw, b_pw = params["w_pw"], params["b_pw"]

    N, Cin, H, W = x_nchw.shape
    K, pad, kpl = kernel_size, padding, kernels_per_layer
    Cdw = Cin * kpl
    Cout = w_pw.shape[0]
    H_out = H + 2 * pad - K + 1
    W_out = W + 2 * pad - K + 1
    Hp, Wp = H + 2 * pad, W + 2 * pad
    Nout = W_out * Cout
    Lraw = Wp * Cdw
    Lpad = ((Lraw + 127) // 128) * 128                         # full-lane contraction dim

    # NCHW -> NHWC; the zero padding fuses into this already-required relayout.
    xh = jnp.transpose(x_nchw, (0, 2, 3, 1)).astype(jnp.float32)
    if kpl > 1:
        # Depthwise output channel j reads input channel j // kpl.
        xh = jnp.repeat(xh, kpl, axis=-1)
    xp = jnp.pad(xh, ((0, 0), (pad, pad), (pad, pad), (0, 0)))
    xp = xp.reshape(N, Hp, Lraw)                               # lane-dense, (w, c) interleaved
    if Lpad > Lraw:
        xp = jnp.pad(xp, ((0, 0), (0, 0), (0, Lpad - Lraw)))

    # Fold depthwise taps + pointwise mixing into K banded matrices:
    #   M_ky[(w+kx)*Cdw + c, w*Cout + o] = w_dw[c, ky, kx] * w_pw[o, c]
    w_dw_kk = w_dw[:, 0, :, :].astype(jnp.float32)                           # (Cdw, K, K)
    w_pw_mat = jnp.transpose(w_pw[:, :, 0, 0], (1, 0)).astype(jnp.float32)   # (Cdw, Cout)
    eye = jnp.eye(W_out, dtype=jnp.float32)
    bands = []
    for ky in range(K):
        m = jnp.zeros((Lraw, Nout), jnp.float32)
        for kx in range(K):
            a = w_dw_kk[:, ky, kx][:, None] * w_pw_mat                       # (Cdw, Cout)
            s = jnp.pad(eye, ((kx, K - 1 - kx), (0, 0)))                     # (Wp, W_out) shift
            m = m + jnp.kron(s, a)
        bands.append(m)
    w_band = jnp.stack(bands, axis=0)                                        # (K, Lraw, Nout)
    if Lpad > Lraw:
        w_band = jnp.pad(w_band, ((0, 0), (0, Lpad - Lraw), (0, 0)))

    # Fold the depthwise bias through the pointwise conv -> single bias stream.
    b_eff = b_pw.astype(jnp.float32) + b_dw.astype(jnp.float32) @ w_pw_mat   # (Cout,)
    b_tiled = jnp.tile(b_eff, W_out).reshape(1, Nout)

    Nb = _pick_batch_block(N, Hp, Lpad, H_out, Nout)

    # Right-size the VMEM limit to the actual working set (+slack).
    block_bytes = (2 * Nb * (Hp * Lpad + H_out * Nout)
                   + 2 * (K * Lpad * Nout + Nout)) * 4
    vmem_limit = int(min(64 << 20, max(4 << 20, 2 * block_bytes + (1 << 20))))

    kernel = functools.partial(_dwsep_kernel, K=K, H_out=H_out)

    out = pl.pallas_call(
        kernel,
        out_shape=jax.ShapeDtypeStruct((N, H_out, Nout), jnp.float32),
        grid=(N // Nb,),
        in_specs=[
            pl.BlockSpec((Nb, Hp, Lpad), lambda n: (n, 0, 0)),
            pl.BlockSpec((K, Lpad, Nout), lambda n: (0, 0, 0)),
            pl.BlockSpec((1, Nout), lambda n: (0, 0)),
        ],
        out_specs=pl.BlockSpec((Nb, H_out, Nout), lambda n: (n, 0, 0)),
        compiler_params=pltpu.CompilerParams(
            dimension_semantics=("parallel",),
            vmem_limit_bytes=vmem_limit),
    )(xp, w_band, b_tiled)

    out = out.reshape(N, H_out, W_out, Cout)
    return jnp.transpose(out, (0, 3, 1, 2))                    # NHWC -> NCHW


def init_params(key, in_channels, output_channels, kernel_size,
                kernels_per_layer=1):
    k1, k2, k3, k4 = jax.random.split(key, 4)
    cdw = in_channels * kernels_per_layer
    return {
        # depthwise: Conv2d(Cin, Cin*kpl, k, groups=Cin) -> weight (Cdw, 1, K, K)
        "w_dw": jax.random.normal(k1, (cdw, 1, kernel_size, kernel_size),
                                  jnp.float32) * 0.1,
        "b_dw": jax.random.normal(k2, (cdw,), jnp.float32) * 0.1,
        # pointwise: Conv2d(Cdw, Cout, 1) -> weight (Cout, Cdw, 1, 1)
        "w_pw": jax.random.normal(k3, (output_channels, cdw, 1, 1),
                                  jnp.float32) * 0.1,
        "b_pw": jax.random.normal(k4, (output_channels,), jnp.float32) * 0.1,
    }


def _reference(x_nchw, params, *, padding):
    """Pure-JAX reference (lax.conv) for correctness check."""
    cin = x_nchw.shape[1]
    y = jax.lax.conv_general_dilated(
        x_nchw, params["w_dw"], window_strides=(1, 1),
        padding=[(padding, padding), (padding, padding)],
        dimension_numbers=("NCHW", "OIHW", "NCHW"),
        feature_group_count=cin, precision=jax.lax.Precision.HIGHEST)
    y = y + params["b_dw"][None, :, None, None]
    z = jax.lax.conv_general_dilated(
        y, params["w_pw"], window_strides=(1, 1), padding=[(0, 0), (0, 0)],
        dimension_numbers=("NCHW", "OIHW", "NCHW"),
        precision=jax.lax.Precision.HIGHEST)
    return z + params["b_pw"][None, :, None, None]


if __name__ == "__main__":
    key = jax.random.PRNGKey(0)
    kx_, kp_ = jax.random.split(key)

    N, Cin, H, W = 2, 4, 16, 16
    Cout, K, pad, kpl = 8, 3, 1, 1

    x = jax.random.normal(kx_, (N, Cin, H, W), jnp.float32)
    params = init_params(kp_, Cin, Cout, K, kernels_per_layer=kpl)

    out = depthwise_separable_conv(x, params, kernel_size=K, padding=pad,
                                   kernels_per_layer=kpl)
    out = jax.block_until_ready(out)

    ref = _reference(x, params, padding=pad)
    H_out = H + 2 * pad - K + 1
    W_out = W + 2 * pad - K + 1
    assert out.shape == (N, Cout, H_out, W_out), out.shape
    max_err = float(jnp.max(jnp.abs(out - ref)))
    assert jnp.allclose(out, ref, atol=2e-4, rtol=2e-4), max_err

    print("KERNEL_OK")
</pallas_src>

<mosaic_0001>
module attributes {stable_mosaic.version = 11 : i64} {
  func.func @_dwsep_kernel(%arg0: i32, %arg1: memref<1x18x128xf32, #tpu.memory_space<vmem>>, %arg2: memref<3x128x128xf32, #tpu.memory_space<vmem>>, %arg3: memref<1x128xf32, #tpu.memory_space<vmem>>, %arg4: memref<1x16x128xf32, #tpu.memory_space<vmem>>) attributes {dimension_semantics = [#tpu.dimension_semantics<parallel>], iteration_bounds = array<i64: 2>, scalar_prefetch = 0 : i64, scratch_operands = 0 : i64, tpu.core_type = #tpu.core_type<tc>, window_params = [{transform_indices = @transform_0, window_bounds = array<i64: 1, 18, 128>}, {pipeline_mode = #tpu.pipeline_mode<synchronous>, transform_indices = @transform_1, window_bounds = array<i64: 3, 128, 128>}, {pipeline_mode = #tpu.pipeline_mode<synchronous>, transform_indices = @transform_2, window_bounds = array<i64: 1, 128>}, {transform_indices = @transform_3, window_bounds = array<i64: 1, 16, 128>}]} {
    %cst = arith.constant 0.000000e+00 : f32
    %0 = vector.broadcast %cst : f32 to vector<16x128xf32>
    %c0 = arith.constant 0 : index
    %c0_0 = arith.constant 0 : index
    %c0_1 = arith.constant 0 : index
    %1 = vector.load %arg1[%c0, %c0_0, %c0_1] : memref<1x18x128xf32, #tpu.memory_space<vmem>>, vector<1x16x128xf32>
    %2 = vector.shape_cast %1 : vector<1x16x128xf32> to vector<16x128xf32>
    %c0_2 = arith.constant 0 : index
    %c0_3 = arith.constant 0 : index
    %c0_4 = arith.constant 0 : index
    %3 = vector.load %arg2[%c0_2, %c0_3, %c0_4] : memref<3x128x128xf32, #tpu.memory_space<vmem>>, vector<1x128x128xf32>
    %4 = vector.shape_cast %3 : vector<1x128x128xf32> to vector<128x128xf32>
    %cst_5 = arith.constant dense<0.000000e+00> : vector<16x128xf32>
    %5 = tpu.matmul %2, %4, %cst_5 {dimension_numbers = #tpu.dot_dimension_numbers<[1], [0], [0], [1], [0, 0, 1, 1], [], []>} : vector<16x128xf32>, vector<128x128xf32>, vector<16x128xf32> -> vector<16x128xf32>
    %6 = arith.addf %0, %5 : vector<16x128xf32>
    %c0_6 = arith.constant 0 : index
    %c1 = arith.constant 1 : index
    %c0_7 = arith.constant 0 : index
    %7 = vector.load %arg1[%c0_6, %c1, %c0_7] : memref<1x18x128xf32, #tpu.memory_space<vmem>>, vector<1x16x128xf32>
    %8 = vector.shape_cast %7 : vector<1x16x128xf32> to vector<16x128xf32>
    %c1_8 = arith.constant 1 : index
    %c0_9 = arith.constant 0 : index
    %c0_10 = arith.constant 0 : index
    %9 = vector.load %arg2[%c1_8, %c0_9, %c0_10] : memref<3x128x128xf32, #tpu.memory_space<vmem>>, vector<1x128x128xf32>
    %10 = vector.shape_cast %9 : vector<1x128x128xf32> to vector<128x128xf32>
    %cst_11 = arith.constant dense<0.000000e+00> : vector<16x128xf32>
    %11 = tpu.matmul %8, %10, %cst_11 {dimension_numbers = #tpu.dot_dimension_numbers<[1], [0], [0], [1], [0, 0, 1, 1], [], []>} : vector<16x128xf32>, vector<128x128xf32>, vector<16x128xf32> -> vector<16x128xf32>
    %12 = arith.addf %6, %11 : vector<16x128xf32>
    %c0_12 = arith.constant 0 : index
    %c2 = arith.constant 2 : index
    %c0_13 = arith.constant 0 : index
    %13 = vector.load %arg1[%c0_12, %c2, %c0_13] : memref<1x18x128xf32, #tpu.memory_space<vmem>>, vector<1x16x128xf32>
    %14 = vector.shape_cast %13 : vector<1x16x128xf32> to vector<16x128xf32>
    %c2_14 = arith.constant 2 : index
    %c0_15 = arith.constant 0 : index
    %c0_16 = arith.constant 0 : index
    %15 = vector.load %arg2[%c2_14, %c0_15, %c0_16] : memref<3x128x128xf32, #tpu.memory_space<vmem>>, vector<1x128x128xf32>
    %16 = vector.shape_cast %15 : vector<1x128x128xf32> to vector<128x128xf32>
    %cst_17 = arith.constant dense<0.000000e+00> : vector<16x128xf32>
    %17 = tpu.matmul %14, %16, %cst_17 {dimension_numbers = #tpu.dot_dimension_numbers<[1], [0], [0], [1], [0, 0, 1, 1], [], []>} : vector<16x128xf32>, vector<128x128xf32>, vector<16x128xf32> -> vector<16x128xf32>
    %18 = arith.addf %12, %17 : vector<16x128xf32>
    %c0_18 = arith.constant 0 : index
    %c0_19 = arith.constant 0 : index
    %19 = vector.load %arg3[%c0_18, %c0_19] : memref<1x128xf32, #tpu.memory_space<vmem>>, vector<1x128xf32>
    %20 = vector.broadcast %19 : vector<1x128xf32> to vector<16x128xf32>
    %21 = arith.addf %18, %20 : vector<16x128xf32>
    %22 = vector.shape_cast %21 : vector<16x128xf32> to vector<1x16x128xf32>
    %c0_20 = arith.constant 0 : index
    %c0_21 = arith.constant 0 : index
    %c0_22 = arith.constant 0 : index
    %23 = vector.load %arg4[%c0_20, %c0_21, %c0_22] : memref<1x16x128xf32, #tpu.memory_space<vmem>>, vector<1x16x128xf32>
    tpu.vector_store %arg4[%c0_20, %c0_21, %c0_22], %22 {strides = array<i32>} : memref<1x16x128xf32, #tpu.memory_space<vmem>>, vector<1x16x128xf32>,
    return
  }
  func.func @transform_0(%arg0: i32) -> (i32, i32, i32) {
    %c0_i32 = arith.constant 0 : i32
    %c0_i32_0 = arith.constant 0 : i32
    %c0_i32_1 = arith.constant 0 : i32
    return %arg0, %c0_i32, %c0_i32_0 : i32, i32, i32
  }
  func.func @transform_1(%arg0: i32) -> (i32, i32, i32) {
    %c0_i32 = arith.constant 0 : i32
    %c0_i32_0 = arith.constant 0 : i32
    %c0_i32_1 = arith.constant 0 : i32
    %c0_i32_2 = arith.constant 0 : i32
    return %c0_i32, %c0_i32_0, %c0_i32_1 : i32, i32, i32
  }
  func.func @transform_2(%arg0: i32) -> (i32, i32) {
    %c0_i32 = arith.constant 0 : i32
    %c0_i32_0 = arith.constant 0 : i32
    %c0_i32_1 = arith.constant 0 : i32
    return %c0_i32, %c0_i32_0 : i32, i32
  }
  func.func @transform_3(%arg0: i32) -> (i32, i32, i32) {
    %c0_i32 = arith.constant 0 : i32
    %c0_i32_0 = arith.constant 0 : i32
    %c0_i32_1 = arith.constant 0 : i32
    return %arg0, %c0_i32, %c0_i32_0 : i32, i32, i32
  }
}

</mosaic_0001>

<llo_original>
// kernel: tpu_custom_call.1
$region0: #{tpu_custom_call.1}
  #allocation0 [shape = 'u32[]', space=smem, size = 0x4, offset = 0x4, fixed_abs, tag = 'smem constant byte address 0x4 - core index']
  #allocation1 [shape = 'u32[144,128]{1,0:T(1,128)}', space=vmem, size = 0x12000, scoped, tag = 'internal scratch']
  %s0 = inlined_call_operand.vmem [shape: f32[2,18,128], index: 0, kind: input, shape index: {}]
  %s1 = inlined_call_operand.hbm [shape: f32[3,128,128], index: 1, kind: input, shape index: {}]
  %s2 = inlined_call_operand.vmem [shape: f32[1,128], index: 2, kind: input, shape index: {}]
  %s3 = inlined_call_operand.hbm [shape: f32[2,16,128], index: 3, kind: output, shape index: {}]
  %s4 = sld [smem:[#allocation0]]
  $region49: #{tpu_custom_call.1} parent=0
    _
  %s6 = ssub.s32 1, %s4
  %s7 = scalar_select 0, %s6, %s4
  $region1: #{tpu_custom_call.1} parent=0
    #allocation2 [shape = 'u8[196608]{0}', space=vmem, size = 0x30000, scoped, tag = 'input window, operand 1, single buffered']
    #allocation3 [shape = 's32[2]{0}', space=sflag, size = 0x8, scoped, tag = 'scoped memory for tpu_custom_call.1']
    #allocation4 [shape = 's32[2]{0}', space=sflag, size = 0x8, scoped, tag = 'scoped memory for tpu_custom_call.1']
    #allocation5 [shape = 'u8[16384]{0}', space=vmem, size = 0x4000, scoped, tag = 'output window, operand 0']
    %8 = vsyncpa [#allocation3], 0
    %9 = vsyncpa [#allocation4], 0
    %s10 = scalar_lea.sflag [#allocation4], 1
    %11 = vsyncpa %s10, 0
    loop: start=0, step=1, limit=4
    $region2: #{tpu_custom_call.1} parent=1 // loop_pre_header
      _
    $region3: #{tpu_custom_call.1} parent=1 // loop_header
      %s13 = sphi 0, %s17
      %p14 = scmp.ge.s32.totalorder %s13, 4
      %s23 = sphi 0, %s25
      %s26 = sphi 0, %s23
      %s27 = sphi 0, %s26
      %s43 = sphi 0, %s27
      %s47 = sphi 0, %s47
      %s49 = sphi 0, %s47
      %s50 = sphi 0, %s49
      %s64 = sphi 0, %s50
      %s68 = sphi 0, %s68
      %s70 = sphi 0, %s68
      %s71 = sphi 0, %s70
      %s85 = sphi 0, %s71
      %s91 = sphi 0, %s93
      %s94 = sphi 0, %s91
      %s95 = sphi 0, %s94
      %s111 = sphi 0, %s95
    $region4: #{tpu_custom_call.1} parent=1 // loop_header_branch
      %16 = sbr.rel (%p14) target = $region8
    $region5: #{tpu_custom_call.1} parent=1 // loop_body
      %s18 = ssub.s32 %s13, 1
      %s19 = ssub.s32 %s13, 2
      %s20 = sadd.s32 %s13, 1
      %s21 = ssub.s32 %s13, %s20
      %p22 = scmp.eq.s32.totalorder %s21, 0
      %s24 = sadd.s32 %s23, 1
      %s25 = scalar_select %p22, %s23, %s24
      %p28 = pneg %p22
      %p29 = scmp.eq.s32.totalorder %s13, 1
      %p30 = por %p28, %p29
      %p31 = scmp.ne.s32.totalorder %s23, %s26
      %p32 = scmp.eq.s32.totalorder %s13, 0
      %p33 = por %p31, %p32
      %p34 = scmp.ne.s32.totalorder %s23, %s26
      %p35 = scmp.eq.s32.totalorder %s18, 1
      %p36 = por %p34, %p35
      %p37 = scmp.ne.s32.totalorder %s26, %s27
      %p38 = scmp.eq.s32.totalorder %s18, 0
      %p39 = por %p37, %p38
      %p40 = scmp.ne.s32.totalorder %s26, %s27
      %p41 = scmp.eq.s32.totalorder %s19, 1
      %p42 = por %p40, %p41
      %p44 = scmp.ne.s32.totalorder %s27, %s43
      %p45 = scmp.eq.s32.totalorder %s19, 0
      %p46 = por %p44, %p45
      %s48 = sadd.s32 %s47, 1
      %p51 = scmp.eq.s32.totalorder %s13, 1
      %p52 = scmp.ne.s32.totalorder %s47, %s49
      %p53 = scmp.eq.s32.totalorder %s13, 0
      %p54 = por %p52, %p53
      %p55 = scmp.ne.s32.totalorder %s47, %s49
      %p56 = scmp.eq.s32.totalorder %s18, 1
      %p57 = por %p55, %p56
      %p58 = scmp.ne.s32.totalorder %s49, %s50
      %p59 = scmp.eq.s32.totalorder %s18, 0
      %p60 = por %p58, %p59
      %p61 = scmp.ne.s32.totalorder %s49, %s50
      %p62 = scmp.eq.s32.totalorder %s19, 1
      %p63 = por %p61, %p62
      %p65 = scmp.ne.s32.totalorder %s50, %s64
      %p66 = scmp.eq.s32.totalorder %s19, 0
      %p67 = por %p65, %p66
      %s69 = sadd.s32 %s68, 1
      %p72 = scmp.eq.s32.totalorder %s13, 1
      %p73 = scmp.ne.s32.totalorder %s68, %s70
      %p74 = scmp.eq.s32.totalorder %s13, 0
      %p75 = por %p73, %p74
      %p76 = scmp.ne.s32.totalorder %s68, %s70
      %p77 = scmp.eq.s32.totalorder %s18, 1
      %p78 = por %p76, %p77
      %p79 = scmp.ne.s32.totalorder %s70, %s71
      %p80 = scmp.eq.s32.totalorder %s18, 0
      %p81 = por %p79, %p80
      %p82 = scmp.ne.s32.totalorder %s70, %s71
      %p83 = scmp.eq.s32.totalorder %s19, 1
      %p84 = por %p82, %p83
      %p86 = scmp.ne.s32.totalorder %s71, %s85
      %p87 = scmp.eq.s32.totalorder %s19, 0
      %p88 = por %p86, %p87
      %s89 = ssub.s32 %s13, %s20
      %p90 = scmp.eq.s32.totalorder %s89, 0
      %s92 = sadd.s32 %s91, 1
      %s93 = scalar_select %p90, %s91, %s92
      %p96 = pneg %p90
      %p97 = scmp.eq.s32.totalorder %s13, 1
      %p98 = por %p96, %p97
      %p99 = scmp.ne.s32.totalorder %s91, %s94
      %p100 = scmp.eq.s32.totalorder %s13, 0
      %p101 = por %p99, %p100
      %p102 = scmp.ne.s32.totalorder %s91, %s94
      %p103 = scmp.eq.s32.totalorder %s18, 1
      %p104 = por %p102, %p103
      %p105 = scmp.ne.s32.totalorder %s94, %s95
      %p106 = scmp.eq.s32.totalorder %s18, 0
      %p107 = por %p105, %p106
      %p108 = scmp.ne.s32.totalorder %s94, %s95
      %p109 = scmp.eq.s32.totalorder %s19, 1
      %p110 = por %p108, %p109
      %p112 = scmp.ne.s32.totalorder %s95, %s111
      %p113 = scmp.eq.s32.totalorder %s19, 0
      %p114 = por %p112, %p113
      %p115 = scmp.le.s32.totalorder 1, %s13
      %p116 = scmp.lt.s32.totalorder %s13, 3
      %p117 = pnand %p115, %p116
      %p118 = pneg %p117
      // Predicated region
      $region9: #{tpu_custom_call.1} parent=5 // pred_check
        _
      $region10: #{tpu_custom_call.1} parent=5 // pred_check_branch
        %120 = sbr.rel (%p117) target = $region12
      $region11: #{tpu_custom_call.1} parent=5 // pred_region
        %s121 = ssub.s32 %s13, 1
        // Predicated region
        $region13: #{tpu_custom_call.1} parent=11 // pred_check
          %p122 = pneg %p60
        $region14: #{tpu_custom_call.1} parent=11 // pred_check_branch
          %124 = sbr.rel (%p122) target = $region16
        $region15: #{tpu_custom_call.1} parent=11 // pred_region
          %s126 = ssub.s32 6144, 6144
          %127 = vsyncadd [#allocation3], %s126
          %s128 = sshll.u32 [#allocation2], 4
          %s129 = int_to_ptr.vmem [resolvable:$true] %s128
          %134 = dma.hbm_to_vmem [thread:$0]  %s1, 6144, %s129, [#allocation3], 128, 128, 8
        $region16: #{tpu_custom_call.1} parent=11 // pred_fallthru
          _
        // Predicated region
        $region17: #{tpu_custom_call.1} parent=11 // pred_check
          %p135 = pneg %p81
        $region18: #{tpu_custom_call.1} parent=11 // pred_check_branch
          %137 = sbr.rel (%p135) target = $region20
        $region19: #{tpu_custom_call.1} parent=11 // pred_region
          _
        $region20: #{tpu_custom_call.1} parent=11 // pred_fallthru
          _
      $region12: #{tpu_custom_call.1} parent=5 // pred_fallthru
        _
      %p138 = scmp.lt.s32.totalorder %s13, 2
      // Predicated region
      $region21: #{tpu_custom_call.1} parent=5 // pred_check
        %p139 = pneg %p138
      $region22: #{tpu_custom_call.1} parent=5 // pred_check_branch
        %141 = sbr.rel (%p139) target = $region24
      $region23: #{tpu_custom_call.1} parent=5 // pred_region
        // Predicated region
        $region25: #{tpu_custom_call.1} parent=23 // pred_check
          %p142 = pneg %p33
        $region26: #{tpu_custom_call.1} parent=23 // pred_check_branch
          %144 = sbr.rel (%p142) target = $region28
        $region27: #{tpu_custom_call.1} parent=23 // pred_region
          %p145 = scmp.lt.s32.totalorder %s13, 1
          %s146 = scalar_select %p145, %s13, 1
          %s147 = smul.addr %s146, 3
          %s148 = smul.addr %s147, 8
          %s149 = scalar_lea.vmem %s0, %s148
        $region28: #{tpu_custom_call.1} parent=23 // pred_fallthru
          _
      $region24: #{tpu_custom_call.1} parent=5 // pred_fallthru
        _
      %p150 = scmp.le.s32.totalorder 1, %s13
      %p151 = scmp.lt.s32.totalorder %s13, 3
      %p152 = pnand %p150, %p151
      %p153 = pneg %p152
      // Predicated region
      $region29: #{tpu_custom_call.1} parent=5 // pred_check
        _
      $region30: #{tpu_custom_call.1} parent=5 // pred_check_branch
        %155 = sbr.rel (%p152) target = $region32
      $region31: #{tpu_custom_call.1} parent=5 // pred_region
        %s156 = ssub.s32 %s13, 1
        // Predicated region
        $region33: #{tpu_custom_call.1} parent=31 // pred_check
          %p157 = pneg %p60
        $region34: #{tpu_custom_call.1} parent=31 // pred_check_branch
          %159 = sbr.rel (%p157) target = $region36
        $region35: #{tpu_custom_call.1} parent=31 // pred_region
          %160 = dma.done [#allocation3], 6144
        $region36: #{tpu_custom_call.1} parent=31 // pred_fallthru
          _
        %p161 = scmp.lt.s32.totalorder %s18, 1
        %s162 = scalar_select %p161, %s18, 1
        %s163 = smul.addr %s162, 3
        %s164 = smul.addr %s163, 8
        %s165 = scalar_lea.vmem %s0, %s164
        %p166 = pneg %p39
        %p167 = pneg %p36
        %p168 = pneg %p60
        %p169 = pneg %p57
        %p170 = pneg %p81
        %p171 = pneg %p78
        %p172 = pneg %p107
        %p173 = pneg %p104
        %s174 = sand.u32 %s94, 1
        %s175 = scalar_lea.sflag [#allocation4], %s174
        %s176 = sand.u32 %s94, 1
        %s177 = smul.addr %s176, 16
        %s178 = scalar_lea.vmem [#allocation5], %s177
        %p179 = scmp.lt.s32.totalorder %s18, 1
        %s180 = scalar_select %p179, %s18, 1
        %s181 = smul.addr %s180, 3
        %s182 = smul.addr %s181, 8
        %s183 = scalar_lea.vmem %s0, %s182
        %v184 = vld [vmem:[%s183] sm:$0xff]
        %v185 = vld [vmem:[%s183 + $0x8] sm:$0xff]
        %v186 = vld [vmem:[#allocation2] sm:$0xff]
        %v187 = vld [vmem:[#allocation2 + $0x8] sm:$0xff]
        %v188 = vld [vmem:[#allocation2 + $0x10] sm:$0xff]
        %v189 = vld [vmem:[#allocation2 + $0x18] sm:$0xff]
        %v190 = vld [vmem:[#allocation2 + $0x20] sm:$0xff]
        %v191 = vld [vmem:[#allocation2 + $0x28] sm:$0xff]
        %v192 = vld [vmem:[#allocation2 + $0x30] sm:$0xff]
        %v193 = vld [vmem:[#allocation2 + $0x38] sm:$0xff]
        %v194 = vld [vmem:[#allocation2 + $0x40] sm:$0xff]
        %v195 = vld [vmem:[#allocation2 + $0x48] sm:$0xff]
        %v196 = vld [vmem:[#allocation2 + $0x50] sm:$0xff]
        %v197 = vld [vmem:[#allocation2 + $0x58] sm:$0xff]
        %v198 = vld [vmem:[#allocation2 + $0x60] sm:$0xff]
        %v199 = vld [vmem:[#allocation2 + $0x68] sm:$0xff]
        %v200 = vld [vmem:[#allocation2 + $0x70] sm:$0xff]
        %v201 = vld [vmem:[#allocation2 + $0x78] sm:$0xff]
        %v202 = vld [vmem:[%s183 + $0x1] sm:$0xff]
        %v203 = vld [vmem:[%s183 + $0x9] sm:$0xff]
        %s204 = scalar_lea.vmem [#allocation2], 128
        %v205 = vld [vmem:[%s204] sm:$0xff]
        %v206 = vld [vmem:[%s204 + $0x8] sm:$0xff]
        %v207 = vld [vmem:[%s204 + $0x10] sm:$0xff]
        %v208 = vld [vmem:[%s204 + $0x18] sm:$0xff]
        %v209 = vld [vmem:[%s204 + $0x20] sm:$0xff]
        %v210 = vld [vmem:[%s204 + $0x28] sm:$0xff]
        %v211 = vld [vmem:[%s204 + $0x30] sm:$0xff]
        %v212 = vld [vmem:[%s204 + $0x38] sm:$0xff]
        %v213 = vld [vmem:[%s204 + $0x40] sm:$0xff]
        %v214 = vld [vmem:[%s204 + $0x48] sm:$0xff]
        %v215 = vld [vmem:[%s204 + $0x50] sm:$0xff]
        %v216 = vld [vmem:[%s204 + $0x58] sm:$0xff]
        %v217 = vld [vmem:[%s204 + $0x60] sm:$0xff]
        %v218 = vld [vmem:[%s204 + $0x68] sm:$0xff]
        %v219 = vld [vmem:[%s204 + $0x70] sm:$0xff]
        %v220 = vld [vmem:[%s204 + $0x78] sm:$0xff]
        %221 = vmatprep.subr.mxu0 0.0
        %222 = vmatpush1.msra.mxu0 %v205
        %223 = vmatprep.subr.mxu0 0.0
        %224 = vmatpush1.msra.mxu0 %v206
        %225 = vmatprep.subr.mxu0 0.0
        %226 = vmatpush1.msra.mxu0 %v207
        %227 = vmatprep.subr.mxu0 0.0
        %228 = vmatpush1.msra.mxu0 %v208
        %229 = vmatprep.subr.mxu0 0.0
        %230 = vmatpush1.msra.mxu0 %v209
        %231 = vmatprep.subr.mxu0 0.0
        %232 = vmatpush1.msra.mxu0 %v210
        %233 = vmatprep.subr.mxu0 0.0
        %234 = vmatpush1.msra.mxu0 %v211
        %235 = vmatprep.subr.mxu0 0.0
        %236 = vmatpush1.msra.mxu0 %v212
        %237 = vmatprep.subr.mxu0 0.0
        %238 = vmatpush1.msra.mxu0 %v213
        %239 = vmatprep.subr.mxu0 0.0
        %240 = vmatpush1.msra.mxu0 %v214
        %241 = vmatprep.subr.mxu0 0.0
        %242 = vmatpush1.msra.mxu0 %v215
        %243 = vmatprep.subr.mxu0 0.0
        %244 = vmatpush1.msra.mxu0 %v216
        %245 = vmatprep.subr.mxu0 0.0
        %246 = vmatpush1.msra.mxu0 %v217
        %247 = vmatprep.subr.mxu0 0.0
        %248 = vmatpush1.msra.mxu0 %v218
        %249 = vmatprep.subr.mxu0 0.0
        %250 = vmatpush1.msra.mxu0 %v219
        %251 = vmatprep.subr.mxu0 0.0
        %252 = vmatpush1.msra.mxu0 %v220
        %253 = vmatprep.subr.mxu0 0.0
        %254 = vmatpush1.msra.mxu0 0.0
        %255 = vmatprep.subr.mxu0 0.0
        %256 = vmatpush1.msra.mxu0 0.0
        %257 = vmatprep.subr.mxu0 0.0
        %258 = vmatpush1.msra.mxu0 0.0
        %259 = vmatprep.subr.mxu0 0.0
        %260 = vmatpush1.msra.mxu0 0.0
        %261 = vmatprep.subr.mxu0 0.0
        %262 = vmatpush1.msra.mxu0 0.0
        %263 = vmatprep.subr.mxu0 0.0
        %264 = vmatpush1.msra.mxu0 0.0
        %265 = vmatprep.subr.mxu0 0.0
        %266 = vmatpush1.msra.mxu0 0.0
        %267 = vmatprep.subr.mxu0 0.0
        %268 = vmatpush1.msra.mxu0 0.0
        %269 = vmatprep.subr.mxu0 0.0
        %270 = vmatpush1.msra.mxu0 0.0
        %271 = vmatprep.subr.mxu0 0.0
        %272 = vmatpush1.msra.mxu0 0.0
        %273 = vmatprep.subr.mxu0 0.0
        %274 = vmatpush1.msra.mxu0 0.0
        %275 = vmatprep.subr.mxu0 0.0
        %276 = vmatpush1.msra.mxu0 0.0
        %277 = vmatprep.subr.mxu0 0.0
        %278 = vmatpush1.msra.mxu0 0.0
        %279 = vmatprep.subr.mxu0 0.0
        %280 = vmatpush1.msra.mxu0 0.0
        %281 = vmatprep.subr.mxu0 0.0
        %282 = vmatpush1.msra.mxu0 0.0
        %283 = vmatprep.subr.mxu0 0.0
        %284 = vmatpush1.msra.mxu0 0.0
        %285 = vmatprep.mubr.f32.mxu0 0.0
        %286 = vmatmul.mubr.f32.gmra.mrb[0].mxu0 %v202
        %v287 = vpop.f32.mrb[0].mxu0
        %v288 = vadd.f32 0.0, %v287
        %v289 = vpop.f32.mrb[0].mxu0
        %290 = vmatprep.mubr.f32.mxu0 0.0
        %291 = vmatmul.mubr.f32.gmra.mrb[0].mxu0 %v203
        %v292 = vpop.f32.mrb[0].mxu0
        %v293 = vadd.f32 0.0, %v292
        %v294 = vpop.f32.mrb[0].mxu0
        %295 = vdwg.mxu0
        %296 = vmatprep.subr.mxu0 0.0
        %297 = vmatpush1.msra.mxu0 %v186
        %298 = vmatprep.subr.mxu0 0.0
        %299 = vmatpush1.msra.mxu0 %v187
        %300 = vmatprep.subr.mxu0 0.0
        %301 = vmatpush1.msra.mxu0 %v188
        %302 = vmatprep.subr.mxu0 0.0
        %303 = vmatpush1.msra.mxu0 %v189
        %304 = vmatprep.subr.mxu0 0.0
        %305 = vmatpush1.msra.mxu0 %v190
        %306 = vmatprep.subr.mxu0 0.0
        %307 = vmatpush1.msra.mxu0 %v191
        %308 = vmatprep.subr.mxu0 0.0
        %309 = vmatpush1.msra.mxu0 %v192
        %310 = vmatprep.subr.mxu0 0.0
        %311 = vmatpush1.msra.mxu0 %v193
        %312 = vmatprep.subr.mxu0 0.0
        %313 = vmatpush1.msra.mxu0 %v194
        %314 = vmatprep.subr.mxu0 0.0
        %315 = vmatpush1.msra.mxu0 %v195
        %316 = vmatprep.subr.mxu0 0.0
        %317 = vmatpush1.msra.mxu0 %v196
        %318 = vmatprep.subr.mxu0 0.0
        %319 = vmatpush1.msra.mxu0 %v197
        %320 = vmatprep.subr.mxu0 0.0
        %321 = vmatpush1.msra.mxu0 %v198
        %322 = vmatprep.subr.mxu0 0.0
        %323 = vmatpush1.msra.mxu0 %v199
        %324 = vmatprep.subr.mxu0 0.0
        %325 = vmatpush1.msra.mxu0 %v200
        %326 = vmatprep.subr.mxu0 0.0
        %327 = vmatpush1.msra.mxu0 %v201
        %328 = vmatprep.subr.mxu0 0.0
        %329 = vmatpush1.msra.mxu0 0.0
        %330 = vmatprep.subr.mxu0 0.0
        %331 = vmatpush1.msra.mxu0 0.0
        %332 = vmatprep.subr.mxu0 0.0
        %333 = vmatpush1.msra.mxu0 0.0
        %334 = vmatprep.subr.mxu0 0.0
        %335 = vmatpush1.msra.mxu0 0.0
        %336 = vmatprep.subr.mxu0 0.0
        %337 = vmatpush1.msra.mxu0 0.0
        %338 = vmatprep.subr.mxu0 0.0
        %339 = vmatpush1.msra.mxu0 0.0
        %340 = vmatprep.subr.mxu0 0.0
        %341 = vmatpush1.msra.mxu0 0.0
        %342 = vmatprep.subr.mxu0 0.0
        %343 = vmatpush1.msra.mxu0 0.0
        %344 = vmatprep.subr.mxu0 0.0
        %345 = vmatpush1.msra.mxu0 0.0
        %346 = vmatprep.subr.mxu0 0.0
        %347 = vmatpush1.msra.mxu0 0.0
        %348 = vmatprep.subr.mxu0 0.0
        %349 = vmatpush1.msra.mxu0 0.0
        %350 = vmatprep.subr.mxu0 0.0
        %351 = vmatpush1.msra.mxu0 0.0
        %352 = vmatprep.subr.mxu0 0.0
        %353 = vmatpush1.msra.mxu0 0.0
        %354 = vmatprep.subr.mxu0 0.0
        %355 = vmatpush1.msra.mxu0 0.0
        %356 = vmatprep.subr.mxu0 0.0
        %357 = vmatpush1.msra.mxu0 0.0
        %358 = vmatprep.subr.mxu0 0.0
        %359 = vmatpush1.msra.mxu0 0.0
        %360 = vmatprep.mubr.f32.mxu0 0.0
        %361 = vmatmul.mubr.f32.gmra.mrb[0].mxu0 %v184
        %v362 = vpop.f32.mrb[0].mxu0
        %v363 = vadd.f32 %v288, %v362
        %v364 = vpop.f32.mrb[0].mxu0
        %365 = vmatprep.mubr.f32.mxu0 0.0
        %366 = vmatmul.mubr.f32.gmra.mrb[0].mxu0 %v185
        %v367 = vpop.f32.mrb[0].mxu0
        %v368 = vadd.f32 %v293, %v367
        %v369 = vpop.f32.mrb[0].mxu0
        %370 = vdwg.mxu0
        %v371 = vld [vmem:[%s183 + $0x2] sm:$0xff]
        %v372 = vld [vmem:[%s183 + $0xa] sm:$0xff]
        %s373 = scalar_lea.vmem [#allocation2], 256
        %v374 = vld [vmem:[%s373] sm:$0xff]
        %v375 = vld [vmem:[%s373 + $0x8] sm:$0xff]
        %v376 = vld [vmem:[%s373 + $0x10] sm:$0xff]
        %v377 = vld [vmem:[%s373 + $0x18] sm:$0xff]
        %v378 = vld [vmem:[%s373 + $0x20] sm:$0xff]
        %v379 = vld [vmem:[%s373 + $0x28] sm:$0xff]
        %v380 = vld [vmem:[%s373 + $0x30] sm:$0xff]
        %v381 = vld [vmem:[%s373 + $0x38] sm:$0xff]
        %v382 = vld [vmem:[%s373 + $0x40] sm:$0xff]
        %v383 = vld [vmem:[%s373 + $0x48] sm:$0xff]
        %v384 = vld [vmem:[%s373 + $0x50] sm:$0xff]
        %v385 = vld [vmem:[%s373 + $0x58] sm:$0xff]
        %v386 = vld [vmem:[%s373 + $0x60] sm:$0xff]
        %v387 = vld [vmem:[%s373 + $0x68] sm:$0xff]
        %v388 = vld [vmem:[%s373 + $0x70] sm:$0xff]
        %v389 = vld [vmem:[%s373 + $0x78] sm:$0xff]
        %390 = vmatprep.subr.mxu0 0.0
        %391 = vmatpush1.msra.mxu0 %v374
        %392 = vmatprep.subr.mxu0 0.0
        %393 = vmatpush1.msra.mxu0 %v375
        %394 = vmatprep.subr.mxu0 0.0
        %395 = vmatpush1.msra.mxu0 %v376
        %396 = vmatprep.subr.mxu0 0.0
        %397 = vmatpush1.msra.mxu0 %v377
        %398 = vmatprep.subr.mxu0 0.0
        %399 = vmatpush1.msra.mxu0 %v378
        %400 = vmatprep.subr.mxu0 0.0
        %401 = vmatpush1.msra.mxu0 %v379
        %402 = vmatprep.subr.mxu0 0.0
        %403 = vmatpush1.msra.mxu0 %v380
        %404 = vmatprep.subr.mxu0 0.0
        %405 = vmatpush1.msra.mxu0 %v381
        %406 = vmatprep.subr.mxu0 0.0
        %407 = vmatpush1.msra.mxu0 %v382
        %408 = vmatprep.subr.mxu0 0.0
        %409 = vmatpush1.msra.mxu0 %v383
        %410 = vmatprep.subr.mxu0 0.0
        %411 = vmatpush1.msra.mxu0 %v384
        %412 = vmatprep.subr.mxu0 0.0
        %413 = vmatpush1.msra.mxu0 %v385
        %414 = vmatprep.subr.mxu0 0.0
        %415 = vmatpush1.msra.mxu0 %v386
        %416 = vmatprep.subr.mxu0 0.0
        %417 = vmatpush1.msra.mxu0 %v387
        %418 = vmatprep.subr.mxu0 0.0
        %419 = vmatpush1.msra.mxu0 %v388
        %420 = vmatprep.subr.mxu0 0.0
        %421 = vmatpush1.msra.mxu0 %v389
        %422 = vmatprep.subr.mxu0 0.0
        %423 = vmatpush1.msra.mxu0 0.0
        %424 = vmatprep.subr.mxu0 0.0
        %425 = vmatpush1.msra.mxu0 0.0
        %426 = vmatprep.subr.mxu0 0.0
        %427 = vmatpush1.msra.mxu0 0.0
        %428 = vmatprep.subr.mxu0 0.0
        %429 = vmatpush1.msra.mxu0 0.0
        %430 = vmatprep.subr.mxu0 0.0
        %431 = vmatpush1.msra.mxu0 0.0
        %432 = vmatprep.subr.mxu0 0.0
        %433 = vmatpush1.msra.mxu0 0.0
        %434 = vmatprep.subr.mxu0 0.0
        %435 = vmatpush1.msra.mxu0 0.0
        %436 = vmatprep.subr.mxu0 0.0
        %437 = vmatpush1.msra.mxu0 0.0
        %438 = vmatprep.subr.mxu0 0.0
        %439 = vmatpush1.msra.mxu0 0.0
        %440 = vmatprep.subr.mxu0 0.0
        %441 = vmatpush1.msra.mxu0 0.0
        %442 = vmatprep.subr.mxu0 0.0
        %443 = vmatpush1.msra.mxu0 0.0
        %444 = vmatprep.subr.mxu0 0.0
        %445 = vmatpush1.msra.mxu0 0.0
        %446 = vmatprep.subr.mxu0 0.0
        %447 = vmatpush1.msra.mxu0 0.0
        %448 = vmatprep.subr.mxu0 0.0
        %449 = vmatpush1.msra.mxu0 0.0
        %450 = vmatprep.subr.mxu0 0.0
        %451 = vmatpush1.msra.mxu0 0.0
        %452 = vmatprep.subr.mxu0 0.0
        %453 = vmatpush1.msra.mxu0 0.0
        %454 = vmatprep.mubr.f32.mxu0 0.0
        %455 = vmatmul.mubr.f32.gmra.mrb[0].mxu0 %v371
        %v456 = vpop.f32.mrb[0].mxu0
        %v457 = vadd.f32 0.0, %v456
        %v458 = vpop.f32.mrb[0].mxu0
        %459 = vmatprep.mubr.f32.mxu0 0.0
        %460 = vmatmul.mubr.f32.gmra.mrb[0].mxu0 %v372
        %v461 = vpop.f32.mrb[0].mxu0
        %v462 = vadd.f32 0.0, %v461
        %v463 = vpop.f32.mrb[0].mxu0
        %464 = vdwg.mxu0
        %v465 = vadd.f32 %v363, %v457
        %v466 = vadd.f32 %v368, %v462
        %v467 = vld [vmem:[%s2] sm:$0x1]
        %v469 = vlaneseq
        %v470 = vshrl.u32 %v469, 7
        %v471 = vsub.s32 0, %v470
        %v472 = vrot.slane %v467, %v471
        %v474 = vadd.f32 %v465, %v472
        %v475 = vadd.f32 %v466, %v472
        %476 = vst [vmem:[%s178] sm:$0xff] %v474
        %477 = vst [vmem:[%s178 + $0x8] sm:$0xff] %v475
        %s478 = sand.u32 %s94, 1
        %s479 = scalar_lea.sflag [#allocation4], %s478
        %s480 = sand.u32 %s94, 1
        %s481 = smul.addr %s480, 16
        %s482 = scalar_lea.vmem [#allocation5], %s481
        // Predicated region
        $region37: #{tpu_custom_call.1} parent=31 // pred_check
          %p483 = pneg %p104
        $region38: #{tpu_custom_call.1} parent=31 // pred_check_branch
          %485 = sbr.rel (%p483) target = $region40
        $region39: #{tpu_custom_call.1} parent=31 // pred_region
          %s487 = ssub.s32 256, 256
          %488 = vsyncadd %s479, %s487
          %s489 = smul.addr %s18, 2
          %s490 = smul.addr %s489, 128
          %s491 = scalar_lea.hbm %s3, %s490
          %s492 = sshll.u32 %s482, 4
          %s493 = int_to_ptr.vmem [resolvable:$true] %s492
          %498 = dma.vmem_to_hbm [thread:$0]  %s493, 256, %s491, %s479, 128, 128, 8
        $region40: #{tpu_custom_call.1} parent=31 // pred_fallthru
          _
      $region32: #{tpu_custom_call.1} parent=5 // pred_fallthru
        _
      %p499 = scmp.le.s32.totalorder 2, %s13
      // Predicated region
      $region41: #{tpu_custom_call.1} parent=5 // pred_check
        %p500 = pneg %p499
      $region42: #{tpu_custom_call.1} parent=5 // pred_check_branch
        %502 = sbr.rel (%p500) target = $region44
      $region43: #{tpu_custom_call.1} parent=5 // pred_region
        %s503 = ssub.s32 %s13, 2
        // Predicated region
        $region45: #{tpu_custom_call.1} parent=43 // pred_check
          %p504 = pneg %p110
        $region46: #{tpu_custom_call.1} parent=43 // pred_check_branch
          %506 = sbr.rel (%p504) target = $region48
        $region47: #{tpu_custom_call.1} parent=43 // pred_region
          %s507 = sand.u32 %s95, 1
          %s508 = scalar_lea.sflag [#allocation4], %s507
          %s509 = sand.u32 %s95, 1
          %s510 = smul.addr %s509, 16
          %s511 = scalar_lea.vmem [#allocation5], %s510
          %512 = dma.done %s508, 256
        $region48: #{tpu_custom_call.1} parent=43 // pred_fallthru
          _
      $region44: #{tpu_custom_call.1} parent=5 // pred_fallthru
        _
    $region6: #{tpu_custom_call.1} parent=1 // loop_footer
      %s17 = sadd.s32 1, %s13
    $region7: #{tpu_custom_call.1} parent=1 // loop_footer_branch
      %12 = sbr.rel target = $region3
    $region8: #{tpu_custom_call.1} parent=1 // loop_exit
      _
    %513 = vsyncpa [#allocation3], 1
    %s514 = scalar_lea.sflag [#allocation3], 1
    %515 = vsyncpa %s514, 1
    %516 = vsyncpa [#allocation4], 1
    %s517 = scalar_lea.sflag [#allocation4], 1
    %518 = vsyncpa %s517, 1

</llo_original>
